<compile_context>
chip_gen: v7x
topology: tpu7x:2x2x1
jax: 0.10.0
libtpu: 0.0.40
codegen_flags: <defaults>
</compile_context>

<pallas_src>
import functools

import jax
import jax.numpy as jnp
from jax.experimental import pallas as pl
from jax.experimental.pallas import tpu as pltpu

_LANE = 128


def _vmem_capacity_bytes():
    try:
        info = pltpu.get_tpu_info()
        cap = getattr(info, "vmem_capacity_bytes", None)
        if cap:
            return int(cap)
    except Exception:
        pass
    return 128 * 1024 * 1024  # v5e/v6e size; conservative fallback for sizing


def _num_tensorcores():
    try:
        info = pltpu.get_tpu_info()
        for name in ("num_cores", "tensorcore_count", "num_tensorcores", "core_count"):
            n = getattr(info, name, None)
            if isinstance(n, int) and 0 < n <= 8:
                return n
    except Exception:
        pass
    try:
        n = getattr(jax.devices()[0], "num_cores", None)
        if isinstance(n, int) and 0 < n <= 8:
            return n
    except Exception:
        pass
    # Safe default: on 1-TC chips (v5e/v6e) the extra "parallel" slice simply
    # runs serially on the same core; on v7x it engages both TensorCores.
    return 2


def _cls_loss_kernel(logits_ref, targets_ref, loss_ref, acc_ref,
                     sums_smem, cls_ids_vmem, *, batch, tiles_per_core):
    # logits_ref  : (TB, C) native dtype (f32/bf16), VMEM, double-buffered
    # targets_ref : (TB, 1) int32, VMEM
    # loss_ref    : (1, 128) f32 output block, private to this core (lane 0)
    # acc_ref     : (1, 128) f32 output block, private to this core (lane 0)
    # sums_smem   : (2,) f32 SMEM scratch: [nll partial sum, correct partial sum]
    # cls_ids_vmem: (TB, C) int32 scratch: class-id iota, written once per core
    c = pl.program_id(0)
    t = pl.program_id(1)

    @pl.when(t == 0)
    def _init():
        sums_smem[0] = jnp.float32(0.0)
        sums_smem[1] = jnp.float32(0.0)
        # Hoisted iota: materialize once per core, reload (vld, slack slot)
        # every step instead of regenerating on the saturated VALU.
        cls_ids_vmem[...] = jax.lax.broadcasted_iota(
            jnp.int32, cls_ids_vmem.shape, 1)

    logits = logits_ref[...].astype(jnp.float32)             # (TB, C) f32 math
    targets = targets_ref[...]                               # (TB, 1) int32
    class_ids = cls_ids_vmem[...]                            # (TB, C) int32
    tb, num_classes = logits.shape

    # Mask rows past the true batch (ragged last tile / padded trailing tiles).
    tile = c * tiles_per_core + t
    row_ids = tile * tb + jax.lax.broadcasted_iota(jnp.int32, (tb, 1), 0)
    valid = row_ids < batch                                  # (TB, 1) bool

    # Single shifted pass: LSE, target pick and argmax all read `shifted`.
    row_max = jnp.max(logits, axis=-1, keepdims=True)        # (TB, 1)
    shifted = logits - row_max                                # (TB, C)
    sum_exp = jnp.sum(jnp.exp(shifted), axis=-1, keepdims=True)

    one_hot = class_ids == targets                            # (TB, C)
    tgt_shifted = jnp.sum(jnp.where(one_hot, shifted, 0.0),
                          axis=-1, keepdims=True)             # (TB, 1)
    # nll = (row_max + log(sum_exp)) - (tgt_shifted + row_max): row_max cancels.
    nll = jnp.log(sum_exp) - tgt_shifted
    nll_sum = jnp.sum(jnp.where(valid, nll, 0.0))

    # argmax fused off `shifted`: first index where shifted == 0 (exact, since
    # x - x == 0), matching torch.argmax's first-max tie-break.
    pred = jnp.min(jnp.where(shifted == 0.0, class_ids, num_classes),
                   axis=-1, keepdims=True)                    # (TB, 1)
    correct_sum = jnp.sum(jnp.where(valid & (pred == targets), 1.0, 0.0))

    sums_smem[0] += nll_sum
    sums_smem[1] += correct_sum

    @pl.when(t == pl.num_programs(1) - 1)
    def _finalize():
        # One lane-dense store per core; finalize (/B, *100) is in the wrapper.
        lane = jax.lax.broadcasted_iota(jnp.int32, loss_ref.shape, 1)
        loss_ref[...] = jnp.where(lane == 0, sums_smem[0], 0.0)
        acc_ref[...] = jnp.where(lane == 0, sums_smem[1], 0.0)


def classification_loss(targets, outputs, *, block_rows=None, num_cores=None,
                        vmem_limit_bytes=None):
    """targets: (B,) integer class ids; outputs: (B, C) logits (any float dtype).

    Returns (loss, accuracy) float32 scalars, matching
    ClassificationLoss.forward(targets, outputs) for the CrossEntropy/argmax
    concrete subclass. Logits are consumed in their native dtype (bf16 ok).
    """
    B, C = outputs.shape
    itemsize = jnp.dtype(outputs.dtype).itemsize
    # TODO(synk): targets block is (TB,1) (128x lane padding); tiny absolute
    # cost, kept to avoid an in-kernel lane->sublane relayout of a (1,TB) load.
    targets2d = targets.astype(jnp.int32).reshape(B, 1)

    c_pad = -(-C // _LANE) * _LANE                # lane-padded class dim in VMEM
    vmem_cap = _vmem_capacity_bytes()

    # Per-row VMEM footprint: double-buffered logits block + int32 class-id
    # scratch + lane-padded targets blocks + headroom for the (TB,1) f32 row
    # intermediates that spill to VMEM.
    per_row_vmem = 2 * c_pad * itemsize + c_pad * 4 + 2 * _LANE * 4 + 8 * 512

    if block_rows is None:
        # ~1/5 of physical VMEM for this kernel's working set:
        # ~24 MiB on 128-MiB chips (v5e/v6e), ~12 MiB on v7x (64 MiB).
        budget = min(24 * 1024 * 1024, vmem_cap // 5)
        block_rows = max(8, (budget // per_row_vmem) // 8 * 8)
    if B <= block_rows:
        block_rows = B                            # single tile == full batch dim
    else:
        block_rows = max(8, (int(block_rows) // 8) * 8)

    total_tiles = pl.cdiv(B, block_rows)
    if num_cores is None:
        num_cores = _num_tensorcores()
    num_splits = max(1, min(int(num_cores), total_tiles))
    tiles_per_core = pl.cdiv(total_tiles, num_splits)
    last_tile = total_tiles - 1

    rows_pad = -(-block_rows // 8) * 8
    if vmem_limit_bytes is None:
        vmem_limit_bytes = rows_pad * per_row_vmem + (4 << 20)
        vmem_limit_bytes = min(max(vmem_limit_bytes, 8 << 20),
                               vmem_cap - (4 << 20))

    def tile_idx(c, t):
        # num_splits * tiles_per_core may exceed total_tiles: clamp so padded
        # trailing tiles re-read the last real tile; their rows are masked
        # in-kernel via the (unclamped) logical row index.
        return jnp.minimum(c * tiles_per_core + t, last_tile)

    kernel = functools.partial(_cls_loss_kernel, batch=B,
                               tiles_per_core=tiles_per_core)

    loss_parts, correct_parts = pl.pallas_call(
        kernel,
        out_shape=(
            jax.ShapeDtypeStruct((1, num_splits * _LANE), jnp.float32),
            jax.ShapeDtypeStruct((1, num_splits * _LANE), jnp.float32),
        ),
        grid=(num_splits, tiles_per_core),
        in_specs=[
            pl.BlockSpec((block_rows, C), lambda c, t: (tile_idx(c, t), 0)),
            pl.BlockSpec((block_rows, 1), lambda c, t: (tile_idx(c, t), 0)),
        ],
        out_specs=(
            pl.BlockSpec((1, _LANE), lambda c, t: (0, c)),
            pl.BlockSpec((1, _LANE), lambda c, t: (0, c)),
        ),
        scratch_shapes=[
            pltpu.SMEM((2,), jnp.float32),
            pltpu.VMEM((block_rows, C), jnp.int32),
        ],
        compiler_params=pltpu.CompilerParams(
            dimension_semantics=("parallel", "arbitrary"),
            vmem_limit_bytes=int(vmem_limit_bytes),
        ),
    )(outputs, targets2d)

    # Finalize outside the kernel: reduce per-core partials, mean / percentage.
    inv_b = jnp.float32(1.0 / B)
    loss = jnp.sum(loss_parts) * inv_b
    accuracy = jnp.sum(correct_parts) * (jnp.float32(100.0) * inv_b)
    return loss, accuracy


def _reference(targets, outputs):
    logits = outputs.astype(jnp.float32)
    lse = jax.scipy.special.logsumexp(logits, axis=-1)
    tgt = jnp.take_along_axis(
        logits, targets[:, None].astype(jnp.int32), axis=-1)[:, 0]
    loss = jnp.mean(lse - tgt)
    acc = 100.0 * jnp.mean(
        (jnp.argmax(logits, axis=-1) == targets).astype(jnp.float32))
    return loss, acc


if __name__ == "__main__":
    key = jax.random.PRNGKey(0)
    k1, k2, k3, k4, k5, k6 = jax.random.split(key, 6)

    # 1) small f32 case, single tile (no core split: total_tiles == 1)
    B, C = 8, 32
    outputs = jax.random.normal(k1, (B, C), dtype=jnp.float32)
    targets = jax.random.randint(k2, (B,), 0, C, dtype=jnp.int32)
    loss, acc = classification_loss(targets, outputs)
    jax.block_until_ready((loss, acc))
    rl, ra = _reference(targets, outputs)
    assert jnp.allclose(loss, rl, atol=1e-5, rtol=1e-5), (loss, rl)
    assert jnp.allclose(acc, ra, atol=1e-5, rtol=1e-5), (acc, ra)

    # 2) bf16 logits fed in native dtype (no wrapper-side f32 copy)
    B, C = 16, 128
    outputs = jax.random.normal(k3, (B, C), dtype=jnp.bfloat16)
    targets = jax.random.randint(k4, (B,), 0, C, dtype=jnp.int32)
    loss, acc = classification_loss(targets, outputs)
    jax.block_until_ready((loss, acc))
    rl, ra = _reference(targets, outputs)
    assert jnp.allclose(loss, rl, atol=1e-4, rtol=1e-4), (loss, rl)
    assert jnp.allclose(acc, ra, atol=1e-4, rtol=1e-4), (acc, ra)

    # 3) ragged batch, forced 2-way parallel split + clamped/masked padded tile
    B, C = 20, 256
    outputs = jax.random.normal(k5, (B, C), dtype=jnp.float32)
    targets = jax.random.randint(k6, (B,), 0, C, dtype=jnp.int32)
    loss, acc = classification_loss(targets, outputs, block_rows=8, num_cores=2)
    jax.block_until_ready((loss, acc))
    rl, ra = _reference(targets, outputs)
    assert jnp.allclose(loss, rl, atol=1e-5, rtol=1e-5), (loss, rl)
    assert jnp.allclose(acc, ra, atol=1e-5, rtol=1e-5), (acc, ra)

    print("KERNEL_OK")
</pallas_src>

<mosaic_0001>
module attributes {stable_mosaic.version = 11 : i64} {
  func.func @_cls_loss_kernel(%arg0: i32, %arg1: i32, %arg2: memref<8x32xf32, #tpu.memory_space<vmem>>, %arg3: memref<8x1xi32, #tpu.memory_space<vmem>>, %arg4: memref<1x128xf32, #tpu.memory_space<vmem>>, %arg5: memref<1x128xf32, #tpu.memory_space<vmem>>, %arg6: memref<2xf32, #tpu.memory_space<smem>>, %arg7: memref<8x32xi32, #tpu.memory_space<vmem>>) attributes {dimension_semantics = [#tpu.dimension_semantics<parallel>, #tpu.dimension_semantics<arbitrary>], iteration_bounds = array<i64: 1, 1>, scalar_prefetch = 0 : i64, scratch_operands = 2 : i64, tpu.core_type = #tpu.core_type<tc>, window_params = [{transform_indices = @transform_0, window_bounds = array<i64: 8, 32>}, {transform_indices = @transform_1, window_bounds = array<i64: 8, 1>}, {transform_indices = @transform_2, window_bounds = array<i64: 1, 128>}, {transform_indices = @transform_3, window_bounds = array<i64: 1, 128>}]} {
    %c0_i32 = arith.constant 0 : i32
    %0 = arith.cmpi eq, %arg1, %c0_i32 : i32
    %1 = arith.extui %0 : i1 to i32
    %c0_i32_0 = arith.constant 0 : i32
    %2 = arith.cmpi ne, %1, %c0_i32_0 : i32
    scf.if %2 {
      %cst_22 = arith.constant 0.000000e+00 : f32
      %c0_23 = arith.constant 0 : index
      %59 = memref.load %arg6[%c0_23] : memref<2xf32, #tpu.memory_space<smem>>
      memref.store %cst_22, %arg6[%c0_23] : memref<2xf32, #tpu.memory_space<smem>>
      %cst_24 = arith.constant 0.000000e+00 : f32
      %c1_25 = arith.constant 1 : index
      %60 = memref.load %arg6[%c1_25] : memref<2xf32, #tpu.memory_space<smem>>
      memref.store %cst_24, %arg6[%c1_25] : memref<2xf32, #tpu.memory_space<smem>>
      %61 = tpu.iota {dimensions = array<i32: 1>} : vector<8x32xi32>
      %c0_26 = arith.constant 0 : index
      %c0_27 = arith.constant 0 : index
      %62 = vector.load %arg7[%c0_26, %c0_27] : memref<8x32xi32, #tpu.memory_space<vmem>>, vector<8x32xi32>
      tpu.vector_store %arg7[%c0_26, %c0_27], %61 {strides = array<i32>} : memref<8x32xi32, #tpu.memory_space<vmem>>, vector<8x32xi32>,
    } else {
    }
    %c0 = arith.constant 0 : index
    %c0_1 = arith.constant 0 : index
    %3 = vector.load %arg2[%c0, %c0_1] : memref<8x32xf32, #tpu.memory_space<vmem>>, vector<8x32xf32>
    %c0_2 = arith.constant 0 : index
    %c0_3 = arith.constant 0 : index
    %4 = vector.load %arg3[%c0_2, %c0_3] : memref<8x1xi32, #tpu.memory_space<vmem>>, vector<8x1xi32>
    %c0_4 = arith.constant 0 : index
    %c0_5 = arith.constant 0 : index
    %5 = vector.load %arg7[%c0_4, %c0_5] : memref<8x32xi32, #tpu.memory_space<vmem>>, vector<8x32xi32>
    %c1_i32 = arith.constant 1 : i32
    %6 = arith.muli %arg0, %c1_i32 : i32
    %7 = arith.addi %6, %arg1 : i32
    %c8_i32 = arith.constant 8 : i32
    %8 = arith.muli %7, %c8_i32 : i32
    %9 = tpu.iota {dimensions = array<i32: 0>} : vector<8x1xi32>
    %10 = vector.broadcast %8 : i32 to vector<8x1xi32>
    %11 = arith.addi %10, %9 : vector<8x1xi32>
    %c8_i32_6 = arith.constant 8 : i32
    %12 = vector.broadcast %c8_i32_6 : i32 to vector<8x1xi32>
    %13 = arith.cmpi slt, %11, %12 : vector<8x1xi32>
    %cst = arith.constant dense<0xFF800000> : vector<8xf32>
    %14 = vector.multi_reduction <maximumf>, %3, %cst [1] : vector<8x32xf32> to vector<8xf32>
    %15 = vector.shape_cast %14 : vector<8xf32> to vector<8x1xf32>
    %16 = vector.broadcast %15 : vector<8x1xf32> to vector<8x32xf32>
    %17 = arith.subf %3, %16 : vector<8x32xf32>
    %18 = math.exp %17 : vector<8x32xf32>
    %cst_7 = arith.constant dense<0.000000e+00> : vector<8xf32>
    %19 = vector.multi_reduction <add>, %18, %cst_7 [1] : vector<8x32xf32> to vector<8xf32>
    %20 = vector.shape_cast %19 : vector<8xf32> to vector<8x1xf32>
    %21 = vector.broadcast %4 : vector<8x1xi32> to vector<8x32xi32>
    %22 = arith.cmpi eq, %5, %21 : vector<8x32xi32>
    %cst_8 = arith.constant 0.000000e+00 : f32
    %23 = vector.broadcast %cst_8 : f32 to vector<8x32xf32>
    %24 = arith.select %22, %17, %23 : vector<8x32xi1>, vector<8x32xf32>
    %cst_9 = arith.constant dense<0.000000e+00> : vector<8xf32>
    %25 = vector.multi_reduction <add>, %24, %cst_9 [1] : vector<8x32xf32> to vector<8xf32>
    %26 = vector.shape_cast %25 : vector<8xf32> to vector<8x1xf32>
    %27 = math.log %20 : vector<8x1xf32>
    %28 = arith.subf %27, %26 : vector<8x1xf32>
    %cst_10 = arith.constant 0.000000e+00 : f32
    %29 = vector.broadcast %cst_10 : f32 to vector<8x1xf32>
    %30 = arith.select %13, %28, %29 : vector<8x1xi1>, vector<8x1xf32>
    %31 = vector.shape_cast %30 : vector<8x1xf32> to vector<1x8x1xf32>
    %cst_11 = arith.constant dense<0.000000e+00> : vector<1xf32>
    %32 = vector.multi_reduction <add>, %31, %cst_11 [1, 2] : vector<1x8x1xf32> to vector<1xf32>
    %33 = vector.shape_cast %32 : vector<1xf32> to vector<1x1x1xf32>
    %34 = vector.extract %33[0, 0, 0] : f32 from vector<1x1x1xf32>
    %cst_12 = arith.constant 0.000000e+00 : f32
    %35 = vector.broadcast %cst_12 : f32 to vector<8x32xf32>
    %36 = arith.cmpf oeq, %17, %35 : vector<8x32xf32>
    %c32_i32 = arith.constant 32 : i32
    %37 = vector.broadcast %c32_i32 : i32 to vector<8x32xi32>
    %38 = arith.select %36, %5, %37 : vector<8x32xi1>, vector<8x32xi32>
    %cst_13 = arith.constant dense<2147483647> : vector<8xi32>
    %39 = vector.multi_reduction <minsi>, %38, %cst_13 [1] : vector<8x32xi32> to vector<8xi32>
    %40 = vector.shape_cast %39 : vector<8xi32> to vector<8x1xi32>
    %41 = arith.cmpi eq, %40, %4 : vector<8x1xi32>
    %42 = arith.andi %13, %41 : vector<8x1xi1>
    %cst_14 = arith.constant 1.000000e+00 : f32
    %cst_15 = arith.constant 0.000000e+00 : f32
    %43 = vector.broadcast %cst_14 : f32 to vector<8x1xf32>
    %44 = vector.broadcast %cst_15 : f32 to vector<8x1xf32>
    %45 = arith.select %42, %43, %44 : vector<8x1xi1>, vector<8x1xf32>
    %46 = vector.shape_cast %45 : vector<8x1xf32> to vector<1x8x1xf32>
    %cst_16 = arith.constant dense<0.000000e+00> : vector<1xf32>
    %47 = vector.multi_reduction <add>, %46, %cst_16 [1, 2] : vector<1x8x1xf32> to vector<1xf32>
    %48 = vector.shape_cast %47 : vector<1xf32> to vector<1x1x1xf32>
    %49 = vector.extract %48[0, 0, 0] : f32 from vector<1x1x1xf32>
    %c0_17 = arith.constant 0 : index
    %50 = memref.load %arg6[%c0_17] : memref<2xf32, #tpu.memory_space<smem>>
    %51 = arith.addf %50, %34 : f32
    %c0_18 = arith.constant 0 : index
    %52 = memref.load %arg6[%c0_18] : memref<2xf32, #tpu.memory_space<smem>>
    memref.store %51, %arg6[%c0_18] : memref<2xf32, #tpu.memory_space<smem>>
    %c1 = arith.constant 1 : index
    %53 = memref.load %arg6[%c1] : memref<2xf32, #tpu.memory_space<smem>>
    %54 = arith.addf %53, %49 : f32
    %c1_19 = arith.constant 1 : index
    %55 = memref.load %arg6[%c1_19] : memref<2xf32, #tpu.memory_space<smem>>
    memref.store %54, %arg6[%c1_19] : memref<2xf32, #tpu.memory_space<smem>>
    %c0_i32_20 = arith.constant 0 : i32
    %56 = arith.cmpi eq, %arg1, %c0_i32_20 : i32
    %57 = arith.extui %56 : i1 to i32
    %c0_i32_21 = arith.constant 0 : i32
    %58 = arith.cmpi ne, %57, %c0_i32_21 : i32
    scf.if %58 {
      %59 = tpu.iota {dimensions = array<i32: 1>} : vector<1x128xi32>
      %c0_i32_22 = arith.constant 0 : i32
      %60 = vector.broadcast %c0_i32_22 : i32 to vector<1x128xi32>
      %61 = arith.cmpi eq, %59, %60 : vector<1x128xi32>
      %c0_23 = arith.constant 0 : index
      %62 = memref.load %arg6[%c0_23] : memref<2xf32, #tpu.memory_space<smem>>
      %cst_24 = arith.constant 0.000000e+00 : f32
      %63 = vector.broadcast %62 : f32 to vector<1x128xf32>
      %64 = vector.broadcast %cst_24 : f32 to vector<1x128xf32>
      %65 = arith.select %61, %63, %64 : vector<1x128xi1>, vector<1x128xf32>
      %c0_25 = arith.constant 0 : index
      %c0_26 = arith.constant 0 : index
      %66 = vector.load %arg4[%c0_25, %c0_26] : memref<1x128xf32, #tpu.memory_space<vmem>>, vector<1x128xf32>
      tpu.vector_store %arg4[%c0_25, %c0_26], %65 {strides = array<i32>} : memref<1x128xf32, #tpu.memory_space<vmem>>, vector<1x128xf32>,
      %c0_i32_27 = arith.constant 0 : i32
      %67 = vector.broadcast %c0_i32_27 : i32 to vector<1x128xi32>
      %68 = arith.cmpi eq, %59, %67 : vector<1x128xi32>
      %c1_28 = arith.constant 1 : index
      %69 = memref.load %arg6[%c1_28] : memref<2xf32, #tpu.memory_space<smem>>
      %cst_29 = arith.constant 0.000000e+00 : f32
      %70 = vector.broadcast %69 : f32 to vector<1x128xf32>
      %71 = vector.broadcast %cst_29 : f32 to vector<1x128xf32>
      %72 = arith.select %68, %70, %71 : vector<1x128xi1>, vector<1x128xf32>
      %c0_30 = arith.constant 0 : index
      %c0_31 = arith.constant 0 : index
      %73 = vector.load %arg5[%c0_30, %c0_31] : memref<1x128xf32, #tpu.memory_space<vmem>>, vector<1x128xf32>
      tpu.vector_store %arg5[%c0_30, %c0_31], %72 {strides = array<i32>} : memref<1x128xf32, #tpu.memory_space<vmem>>, vector<1x128xf32>,
    } else {
    }
    return
  }
  func.func @transform_0(%arg0: i32, %arg1: i32) -> (i32, i32) {
    %c1_i32 = arith.constant 1 : i32
    %0 = arith.muli %arg0, %c1_i32 : i32
    %1 = arith.addi %0, %arg1 : i32
    %c0_i32 = arith.constant 0 : i32
    %2 = arith.minsi %1, %c0_i32 : i32
    %c0_i32_0 = arith.constant 0 : i32
    %c0_i32_1 = arith.constant 0 : i32
    return %2, %c0_i32_0 : i32, i32
  }
  func.func @transform_1(%arg0: i32, %arg1: i32) -> (i32, i32) {
    %c1_i32 = arith.constant 1 : i32
    %0 = arith.muli %arg0, %c1_i32 : i32
    %1 = arith.addi %0, %arg1 : i32
    %c0_i32 = arith.constant 0 : i32
    %2 = arith.minsi %1, %c0_i32 : i32
    %c0_i32_0 = arith.constant 0 : i32
    %c0_i32_1 = arith.constant 0 : i32
    return %2, %c0_i32_0 : i32, i32
  }
  func.func @transform_2(%arg0: i32, %arg1: i32) -> (i32, i32) {
    %c0_i32 = arith.constant 0 : i32
    %c0_i32_0 = arith.constant 0 : i32
    return %c0_i32, %arg0 : i32, i32
  }
  func.func @transform_3(%arg0: i32, %arg1: i32) -> (i32, i32) {
    %c0_i32 = arith.constant 0 : i32
    %c0_i32_0 = arith.constant 0 : i32
    return %c0_i32, %arg0 : i32, i32
  }
}

</mosaic_0001>

<llo_original>
// kernel: tpu_custom_call.1
$region0: #{tpu_custom_call.1}
  #allocation0 [shape = 'u32[]', space=smem, size = 0x4, offset = 0x4, fixed_abs, tag = 'smem constant byte address 0x4 - core index']
  #allocation1 [shape = 'u32[144,128]{1,0:T(1,128)}', space=vmem, size = 0x12000, scoped, tag = 'internal scratch']
  #allocation2 [shape = 'f32[2]{0:T(128)}', space=smem, size = 0x200, scoped, tag = 'scratch operand']
  #allocation3 [shape = 's32[8,32]{1,0:T(8,128)}', space=vmem, size = 0x1000, scoped, tag = 'scratch operand']
  %s0 = inlined_call_operand.vmem [shape: f32[8,32], index: 0, kind: input, shape index: {}]
  %s1 = inlined_call_operand.vmem [shape: s32[8,1], index: 1, kind: input, shape index: {}]
  %s2 = inlined_call_operand.hbm [shape: f32[1,128], index: 2, kind: output, shape index: {0}]
  %s3 = inlined_call_operand.hbm [shape: f32[1,128], index: 3, kind: output, shape index: {1}]
  %4 = xla_tuple %s2, %s3
  %s5 = sld [smem:[#allocation0]]
  $region34: #{tpu_custom_call.1} parent=0
    _
  %s7 = ssub.s32 1, %s5
  %s8 = scalar_select 0, %s7, %s5
  $region1: #{tpu_custom_call.1} parent=0
    #allocation4 [shape = 'u8[512]{0}', space=vmem, size = 0x400, scoped, tag = 'output window, operand 0, single buffered']
    #allocation5 [shape = 's32[1]{0}', space=sflag, size = 0x4, scoped, tag = 'scoped memory for tpu_custom_call.1']
    #allocation6 [shape = 'u8[512]{0}', space=vmem, size = 0x400, scoped, tag = 'output window, operand 1, single buffered']
    #allocation7 [shape = 's32[1]{0}', space=sflag, size = 0x4, scoped, tag = 'scoped memory for tpu_custom_call.1']
    %9 = vsyncpa [#allocation5], 0
    %10 = vsyncpa [#allocation7], 0
    // Predicated region
    $region2: #{tpu_custom_call.1} parent=1 // pred_check
      _
    $region3: #{tpu_custom_call.1} parent=1 // pred_check_branch
      %12 = sbr.rel (0) target = $region5
    $region4: #{tpu_custom_call.1} parent=1 // pred_region
      %s13 = sadd.s32 0, 0
      %p14 = scmp.lt.s32.totalorder %s13, 0
      %s15 = scalar_select %p14, %s13, 0
      %p16 = scmp.lt.s32.totalorder %s15, 0
      %s17 = scalar_select %p16, %s15, 0
      %s18 = smul.addr %s17, 8
      %s19 = scalar_lea.vmem %s0, %s18
      %s20 = sadd.s32 0, 0
      %p21 = scmp.lt.s32.totalorder %s20, 0
      %s22 = scalar_select %p21, %s20, 0
    $region5: #{tpu_custom_call.1} parent=1 // pred_fallthru
      _
    // Predicated region
    $region6: #{tpu_custom_call.1} parent=1 // pred_check
      _
    $region7: #{tpu_custom_call.1} parent=1 // pred_check_branch
      %24 = sbr.rel (0) target = $region9
    $region8: #{tpu_custom_call.1} parent=1 // pred_region
      %s25 = sadd.s32 0, 0
      %p26 = scmp.lt.s32.totalorder %s25, 0
      %s27 = scalar_select %p26, %s25, 0
      %p28 = scmp.lt.s32.totalorder %s27, 0
      %s29 = scalar_select %p28, %s27, 0
      %s30 = smul.addr %s29, 8
      %s31 = scalar_lea.vmem %s1, %s30
      %s32 = sadd.s32 0, 0
      %p33 = scmp.lt.s32.totalorder %s32, 0
      %s34 = scalar_select %p33, %s32, 0
    $region9: #{tpu_custom_call.1} parent=1 // pred_fallthru
      _
    %s35 = sadd.s32 0, 0
    %p36 = scmp.lt.s32.totalorder %s35, 0
    %s37 = scalar_select %p36, %s35, 0
    %p38 = scmp.lt.s32.totalorder %s37, 0
    %s39 = scalar_select %p38, %s37, 0
    %s40 = smul.addr %s39, 8
    %s41 = scalar_lea.vmem %s0, %s40
    %s42 = sadd.s32 0, 0
    %p43 = scmp.lt.s32.totalorder %s42, 0
    %s44 = scalar_select %p43, %s42, 0
    %p45 = scmp.lt.s32.totalorder %s44, 0
    %s46 = scalar_select %p45, %s44, 0
    %s47 = smul.addr %s46, 8
    %s48 = scalar_lea.vmem %s1, %s47
    %s49 = sadd.s32 0, 0
    %p50 = scmp.lt.s32.totalorder %s49, 0
    %s51 = scalar_select %p50, %s49, 0
    %p52 = scmp.lt.s32.totalorder %s51, 0
    %s53 = scalar_select %p52, %s51, 0
    %s54 = smul.addr %s53, 8
    %s55 = scalar_lea.vmem %s0, %s54
    %s56 = sadd.s32 0, 0
    %p57 = scmp.lt.s32.totalorder %s56, 0
    %s58 = scalar_select %p57, %s56, 0
    %s59 = sadd.s32 0, 0
    %p60 = scmp.lt.s32.totalorder %s59, 0
    %s61 = scalar_select %p60, %s59, 0
    %p62 = scmp.lt.s32.totalorder %s61, 0
    %s63 = scalar_select %p62, %s61, 0
    %s64 = smul.addr %s63, 8
    %s65 = scalar_lea.vmem %s1, %s64
    %s66 = sadd.s32 0, 0
    %p67 = scmp.lt.s32.totalorder %s66, 0
    %s68 = scalar_select %p67, %s66, 0
    %p69 = scmp.eq.s32.totalorder 0, 0
    // Predicated region
    $region10: #{tpu_custom_call.1} parent=1 // pred_check
      %p70 = pneg %p69
    $region11: #{tpu_custom_call.1} parent=1 // pred_check_branch
      %72 = sbr.rel (%p70) target = $region13
    $region12: #{tpu_custom_call.1} parent=1 // pred_region
      %s73 = scalar_lea.smem [#allocation2], 0
      %74 = sst [smem:[%s73]] 0.0
      %s75 = scalar_lea.smem [#allocation2], 1
      %76 = sst [smem:[%s75]] 0.0
      %v77 = vlaneseq
      %v78 = vand.u32 %v77, 127
      %vm79 = vcmask 261120
      %80 = vst.msk [vmem:[#allocation3] sm:$0xff] %vm79, %v78
    $region13: #{tpu_custom_call.1} parent=1 // pred_fallthru
      _
    %v81 = vld [vmem:[%s55] sm:$0xff]
    %v82 = vld [vmem:[%s65] sm:$0xff]
    %v83 = vld [vmem:[#allocation3] sm:$0xff]
    %s84 = sadd.s32 0, 0
    %s85 = smul.u32 %s84, 8
    %v86 = vlaneseq
    %v87 = vshrl.u32 %v86, 7
    %v88 = vstv %s85
    %v89 = vadd.s32 %v88, %v87
    %vm90 = vcmp.lt.s32.totalorder %v89, 8
    %vm91 = vcmask 261120
    %v92 = vsel %vm91, %v81, -inf
    %93 = vmax.xlane.f32.xlu0 %v92
    %v94 = vpop.xlane.xlu0 %93
    %v95 = vsub.f32 %v81, %v94
    %v96 = vmul.f32 %v95, 1.442695
    %v97 = vpow.pop %v96
    %v98 = vsel %vm91, %v97, 0.0
    %99 = vadd.xlane.f32.xlu0 %v98
    %v100 = vpop.xlane.xlu0 %99
    %101 = vset.pattern.permute.xlu0 0
    %102 = vperm.xlu0 %101, %v82
    %v103 = vpop.permute.xlu0 %102
    %vm104 = vcmp.eq.s32.totalorder %v83, %v103
    %v105 = vsel %vm104, %v95, 0.0
    %v106 = vsel %vm91, %v105, 0.0
    %107 = vadd.xlane.f32.xlu0 %v106
    %v108 = vpop.xlane.xlu0 %107
    %v109 = vlog2.pop %v100
    %v110 = vmul.f32 %v109, 0.6931472
    %v111 = vsub.f32 %v110, %v108
    %v112 = vsel %vm90, %v111, 0.0
    %vm113 = vcmask 7168
    %v114 = vsel %vm113, %v112, 0.0
    %115 = vadd.xlane.f32.xlu0 %v114
    %v116 = vpop.xlane.xlu0 %115
    %v117 = vrot.slane %v116, 4
    %v118 = vadd.f32 %v116, %v117
    %v119 = vrot.slane %v118, 2
    %v120 = vadd.f32 %v118, %v119
    %v121 = vrot.slane %v120, 1
    %v122 = vadd.f32 %v120, %v121
    %s123 = vtos %v122
    %vm124 = vcmp.eq.f32.partialorder %v95, 0.0
    %v125 = vsel %vm124, %v83, 32
    %v126 = vsel %vm91, %v125, 2147483647
    %v127 = vand.u32 %v126, 65535
    %v128 = vshra.s32 %v126, 16
    %v129 = vcvt.s32.f32 %v127
    %v130 = vcvt.s32.f32 %v128
    %131 = vmin.xlane.f32.xlu0 %v130
    %v132 = vpop.xlane.xlu0 %131
    %vm133 = vcmp.eq.f32.partialorder %v130, %v132
    %v134 = vsel %vm133, %v129, inf
    %135 = vmin.xlane.f32.xlu0 %v134
    %v136 = vpop.xlane.xlu0 %135
    %v137 = vcvt.f32.s32 %v136
    %v138 = vcvt.f32.s32 %v132
    %v139 = vshll.u32 %v138, 16
    %v140 = vadd.s32 %v139, %v137
    %vm141 = vcmp.eq.s32.totalorder %v140, %v82
    %vm142 = vmand %vm90, %vm141
    %v143 = vsel %vm142, 1.0, 0.0
    %v144 = vsel %vm113, %v143, 0.0
    %145 = vadd.xlane.f32.xlu0 %v144
    %v146 = vpop.xlane.xlu0 %145
    %v147 = vrot.slane %v146, 4
    %v148 = vadd.f32 %v146, %v147
    %v149 = vrot.slane %v148, 2
    %v150 = vadd.f32 %v148, %v149
    %v151 = vrot.slane %v150, 1
    %v152 = vadd.f32 %v150, %v151
    %s153 = vtos %v152
    %s154 = sld [smem:[#allocation2]]
    %s155 = sadd.f32 %s154, %s123
    %s156 = scalar_lea.smem [#allocation2], 0
    %157 = sst [smem:[%s156]] %s155
    %s158 = sld [smem:[#allocation2 + $0x1]]
    %s159 = sadd.f32 %s158, %s153
    %s160 = scalar_lea.smem [#allocation2], 1
    %161 = sst [smem:[%s160]] %s159
    // Predicated region
    $region14: #{tpu_custom_call.1} parent=1 // pred_check
      %p162 = pneg %p69
    $region15: #{tpu_custom_call.1} parent=1 // pred_check_branch
      %164 = sbr.rel (%p162) target = $region17
    $region16: #{tpu_custom_call.1} parent=1 // pred_region
      %v165 = vlaneseq
      %v166 = vand.u32 %v165, 127
      %vm167 = vcmp.eq.s32.totalorder %v166, 0
      %s168 = sld [smem:[#allocation2]]
      %v169 = vstv %s168
      %v170 = vsel %vm167, %v169, 0.0
      %171 = vst [vmem:[#allocation4] sm:$0x1] %v170
      %s172 = sld [smem:[#allocation2 + $0x1]]
      %v173 = vstv %s172
      %v174 = vsel %vm167, %v173, 0.0
      %175 = vst [vmem:[#allocation6] sm:$0x1] %v174
    $region17: #{tpu_custom_call.1} parent=1 // pred_fallthru
      _
    // Predicated region
    $region18: #{tpu_custom_call.1} parent=1 // pred_check
      _
    $region19: #{tpu_custom_call.1} parent=1 // pred_check_branch
      %177 = sbr.rel (0) target = $region21
    $region20: #{tpu_custom_call.1} parent=1 // pred_region
      %s179 = ssub.s32 16, 16
      %180 = vsyncadd [#allocation5], %s179
      %s182 = sshll.u32 [#allocation4], 4
      %s183 = int_to_ptr.vmem [resolvable:$true] %s182
      %185 = dma.vmem_to_hbm [thread:$0]  %s183, 16, %s2, [#allocation5]
    $region21: #{tpu_custom_call.1} parent=1 // pred_fallthru
      _
    // Predicated region
    $region22: #{tpu_custom_call.1} parent=1 // pred_check
      _
    $region23: #{tpu_custom_call.1} parent=1 // pred_check_branch
      %187 = sbr.rel (0) target = $region25
    $region24: #{tpu_custom_call.1} parent=1 // pred_region
      %s189 = ssub.s32 16, 16
      %190 = vsyncadd [#allocation7], %s189
      %s192 = sshll.u32 [#allocation6], 4
      %s193 = int_to_ptr.vmem [resolvable:$true] %s192
      %195 = dma.vmem_to_hbm [thread:$0]  %s193, 16, %s3, [#allocation7]
    $region25: #{tpu_custom_call.1} parent=1 // pred_fallthru
      _
    // Predicated region
    $region26: #{tpu_custom_call.1} parent=1 // pred_check
      _
    $region27: #{tpu_custom_call.1} parent=1 // pred_check_branch
      %197 = sbr.rel (0) target = $region29
    $region28: #{tpu_custom_call.1} parent=1 // pred_region
      %198 = dma.done [#allocation5], 16
    $region29: #{tpu_custom_call.1} parent=1 // pred_fallthru
      _
    // Predicated region
    $region30: #{tpu_custom_call.1} parent=1 // pred_check
      _
    $region31: #{tpu_custom_call.1} parent=1 // pred_check_branch
      %200 = sbr.rel (0) target = $region33
    $region32: #{tpu_custom_call.1} parent=1 // pred_region
      %201 = dma.done [#allocation7], 16
    $region33: #{tpu_custom_call.1} parent=1 // pred_fallthru
      _
    %202 = vsyncpa [#allocation5], 1
    %203 = vsyncpa [#allocation7], 1

</llo_original>
